<compile_context>
chip_gen: v7x
topology: tpu7x:2x2x1
jax: 0.10.0
libtpu: 0.0.40
codegen_flags: <defaults>
</compile_context>

<pallas_src>
import jax
import jax.numpy as jnp
from jax.experimental import pallas as pl
from jax.experimental.pallas import tpu as pltpu


def _round_up(x, m):
    return (x + m - 1) // m * m


def _tokens_matmul_kernel(p_ref, w_ref, o_ref):
    """One token-tile grid step: a single lane-dense MXU matmul.

    p_ref: (TT, K_pad)           im2col patch tile (K_pad % 8 == 0, full K extent)
    w_ref: (K_pad, C_out_pad)    reshaped, zero-padded conv weight
    o_ref: (TT, C_out_pad)       token output tile (C_out_pad % 128 == 0)
    """
    o_ref[...] = jnp.dot(
        p_ref[...], w_ref[...], preferred_element_type=jnp.float32
    ).astype(o_ref.dtype)


def conv2d_tokenize_pallas(x_nhwc, weight, stride, padding, *,
                           tile_tokens=1024,
                           compute_dtype=jnp.bfloat16,
                           trim_channels=True):
    """Single conv layer (no bias) + tokenization.

    x_nhwc : (B, H, W, C_in_x) float32.  C_in_x may exceed the weight's C_in
             (zero-padded channels carried over from a previous padded layer).
    weight : (KH, KW, C_in, C_out) float32
    returns: ((B, H_out*W_out, C) float32, H_out, W_out)
             C = C_out if trim_channels else C_out padded to 128.
    """
    b, h, w, c_in_x = x_nhwc.shape
    kh, kw, c_in_w, c_out = weight.shape
    if c_in_x > c_in_w:
        # Input carries zero-padded channels: pad the weight's C_in to match
        # (padded features multiply zero weights -> numerically identical).
        weight = jnp.pad(weight, ((0, 0), (0, 0), (0, c_in_x - c_in_w), (0, 0)))
    c_in = x_nhwc.shape[-1]

    sh = sw = stride
    ph = pw = padding
    h_out = (h + 2 * ph - kh) // sh + 1
    w_out = (w + 2 * pw - kw) // sw + 1
    tokens = h_out * w_out
    k_dim = kh * kw * c_in

    # ---- im2col in the wrapper (bf16 so the glue traffic is halved too).
    # Feature ordering is (kh, kw, c_in), matching weight.reshape(K, C_out).
    x_c = x_nhwc.astype(compute_dtype)
    if sh == kh and sw == kw and ph == 0 and pw == 0 and h % kh == 0 and w % kw == 0:
        # Patchify conv: im2col degenerates to a pure reshape (no 9-slice concat).
        patches = (x_c.reshape(b, h_out, kh, w_out, kw, c_in)
                   .transpose(0, 1, 3, 2, 4, 5)
                   .reshape(b, tokens, k_dim))
    else:
        x_pad = jnp.pad(x_c, ((0, 0), (ph, ph), (pw, pw), (0, 0)))
        cols = []
        for i in range(kh):
            for j in range(kw):
                win = jax.lax.slice(
                    x_pad,
                    (0, i, j, 0),
                    (b, i + (h_out - 1) * sh + 1, j + (w_out - 1) * sw + 1, c_in),
                    (1, sh, sw, 1),
                )  # (B, H_out, W_out, C_in)
                cols.append(win)
        patches = jnp.concatenate(cols, axis=-1).reshape(b, tokens, k_dim)

    # ---- flatten (B, tokens) into one token axis, pad once globally.
    m = b * tokens
    patches = patches.reshape(m, k_dim)

    k_pad = _round_up(k_dim, 8)              # full-extent block: no 128 padding of K
    c_out_pad = _round_up(c_out, 128)        # lane-dense output (unmasked vst)
    tt = min(tile_tokens, _round_up(m, 8))
    m_pad = _round_up(m, tt)

    patches = jnp.pad(patches, ((0, m_pad - m), (0, k_pad - k_dim)))
    w_mat = jnp.pad(
        weight.reshape(k_dim, c_out).astype(compute_dtype),
        ((0, k_pad - k_dim), (0, c_out_pad - c_out)),
    )

    num_tiles = m_pad // tt
    in_bytes = jnp.dtype(compute_dtype).itemsize

    # VMEM actually needed: double-buffered patch + output blocks, plus weight.
    vmem_need = (2 * tt * k_pad * in_bytes
                 + 2 * tt * c_out_pad * 4
                 + 2 * k_pad * c_out_pad * in_bytes)
    vmem_limit = int(min(32 * 1024 * 1024, max(8 * 1024 * 1024, 2 * vmem_need)))

    cost = pl.CostEstimate(
        flops=2 * m_pad * k_pad * c_out_pad,
        transcendentals=0,
        bytes_accessed=(patches.size * in_bytes
                        + w_mat.size * in_bytes
                        + m_pad * c_out_pad * 4),
    )

    out = pl.pallas_call(
        _tokens_matmul_kernel,
        out_shape=jax.ShapeDtypeStruct((m_pad, c_out_pad), jnp.float32),
        grid_spec=pltpu.PrefetchScalarGridSpec(
            num_scalar_prefetch=0,
            grid=(num_tiles,),
            in_specs=[
                pl.BlockSpec((tt, k_pad), lambda ti: (ti, 0)),
                pl.BlockSpec((k_pad, c_out_pad), lambda ti: (0, 0)),
            ],
            out_specs=pl.BlockSpec((tt, c_out_pad), lambda ti: (ti, 0)),
        ),
        compiler_params=pltpu.CompilerParams(
            dimension_semantics=("parallel",),
            vmem_limit_bytes=vmem_limit,
        ),
        cost_estimate=cost,
    )(patches, w_mat)

    out = out[:m].reshape(b, tokens, c_out_pad)
    if trim_channels:
        out = out[..., :c_out]
    return out, h_out, w_out


class TokenizerPallas:
    """JAX/Pallas port of the PyTorch Tokenizer module (conv_bias=False)."""

    def __init__(self, kernel_size, stride, padding, n_conv_layers=1,
                 n_input_channels=3, n_output_channels=64, in_planes=64,
                 conv_bias=False, compute_dtype=jnp.bfloat16, key=None):
        assert not conv_bias, "reference module uses conv_bias=False"
        self.kernel_size = kernel_size
        self.stride = stride
        self.padding = padding
        self.compute_dtype = compute_dtype
        n_filter_list = ([n_input_channels]
                         + [in_planes for _ in range(n_conv_layers - 1)]
                         + [n_output_channels])
        if key is None:
            key = jax.random.PRNGKey(0)
        self.weights = []
        for i in range(n_conv_layers):
            key, sub = jax.random.split(key)
            c_in, c_out = n_filter_list[i], n_filter_list[i + 1]
            fan_in = c_in * kernel_size * kernel_size
            std = (2.0 / fan_in) ** 0.5  # kaiming_normal_ (fan_in, relu gain)
            # weight stored as (KH, KW, C_in, C_out) for NHWC / im2col matmul
            w = std * jax.random.normal(
                sub, (kernel_size, kernel_size, c_in, c_out), jnp.float32
            )
            self.weights.append(w)

    def __call__(self, x_nchw):
        # layout: convert PyTorch NCHW input to NHWC for the kernel (glue).
        x = jnp.transpose(x_nchw, (0, 2, 3, 1)).astype(jnp.float32)
        n_layers = len(self.weights)
        out = None
        for li, w in enumerate(self.weights):
            last = li == n_layers - 1
            out, h_out, w_out = conv2d_tokenize_pallas(
                x, w, self.stride, self.padding,
                compute_dtype=self.compute_dtype,
                trim_channels=last,           # intermediate layers stay lane-padded
            )
            if not last:
                # fold tokens back to the NHWC spatial map, carrying the padded
                # C_out forward (no unpad/re-pad round trip between layers).
                b = out.shape[0]
                x = out.reshape(b, h_out, w_out, out.shape[-1])
        return out  # (B, H_out*W_out, C_out)


def _reference(x_nchw, tok):
    """Pure-JAX reference using lax.conv_general_dilated (f32, like PyTorch)."""
    x = x_nchw.astype(jnp.float32)
    for w in tok.weights:
        # w: (KH, KW, C_in, C_out) -> OIHW
        w_oihw = jnp.transpose(w, (3, 2, 0, 1))
        x = jax.lax.conv_general_dilated(
            x, w_oihw,
            window_strides=(tok.stride, tok.stride),
            padding=[(tok.padding, tok.padding), (tok.padding, tok.padding)],
            dimension_numbers=("NCHW", "OIHW", "NCHW"),
        )
    b, c, h, w_ = x.shape
    return jnp.transpose(x.reshape(b, c, h * w_), (0, 2, 1))


if __name__ == "__main__":
    key = jax.random.PRNGKey(0)
    kx, kw = jax.random.split(key)

    # Small shapes: batch=2, channels=4, spatial=16x16, C_out=32, k=3, s=1, p=1.
    B, C_IN, H, W = 2, 4, 16, 16
    x = jax.random.normal(kx, (B, C_IN, H, W), jnp.float32)

    tok = TokenizerPallas(kernel_size=3, stride=1, padding=1,
                          n_conv_layers=1, n_input_channels=C_IN,
                          n_output_channels=32, in_planes=32,
                          conv_bias=False, key=kw)

    ref = jax.block_until_ready(_reference(x, tok))

    # --- default (bf16 operands, f32 accumulation): fast path, loose tolerance
    out_bf16 = jax.block_until_ready(tok(x))
    assert out_bf16.shape == ref.shape == (B, H * W, 32), (out_bf16.shape, ref.shape)
    assert jnp.allclose(out_bf16, ref, atol=5e-2, rtol=5e-2), float(
        jnp.max(jnp.abs(out_bf16 - ref))
    )

    # --- f32 validation path: matches the PyTorch f32 conv tightly
    tok.compute_dtype = jnp.float32
    out_f32 = jax.block_until_ready(tok(x))
    assert out_f32.shape == ref.shape, (out_f32.shape, ref.shape)
    assert jnp.allclose(out_f32, ref, atol=1e-4, rtol=1e-4), float(
        jnp.max(jnp.abs(out_f32 - ref))
    )

    print("KERNEL_OK")
</pallas_src>

<mosaic_0001>
module attributes {stable_mosaic.version = 11 : i64} {
  func.func @_tokens_matmul_kernel(%arg0: i32, %arg1: memref<512x40xbf16, #tpu.memory_space<vmem>>, %arg2: memref<40x128xbf16, #tpu.memory_space<vmem>>, %arg3: memref<512x128xf32, #tpu.memory_space<vmem>>) attributes {dimension_semantics = [#tpu.dimension_semantics<parallel>], iteration_bounds = array<i64: 1>, scalar_prefetch = 0 : i64, scratch_operands = 0 : i64, tpu.core_type = #tpu.core_type<tc>, window_params = [{transform_indices = @transform_0, window_bounds = array<i64: 512, 40>}, {pipeline_mode = #tpu.pipeline_mode<synchronous>, transform_indices = @transform_1, window_bounds = array<i64: 40, 128>}, {transform_indices = @transform_2, window_bounds = array<i64: 512, 128>}]} {
    %c0 = arith.constant 0 : index
    %c0_0 = arith.constant 0 : index
    %0 = vector.load %arg1[%c0, %c0_0] : memref<512x40xbf16, #tpu.memory_space<vmem>>, vector<512x40xbf16>
    %c0_1 = arith.constant 0 : index
    %c0_2 = arith.constant 0 : index
    %1 = vector.load %arg2[%c0_1, %c0_2] : memref<40x128xbf16, #tpu.memory_space<vmem>>, vector<40x128xbf16>
    %cst = arith.constant dense<0.000000e+00> : vector<512x128xf32>
    %2 = tpu.matmul %0, %1, %cst {dimension_numbers = #tpu.dot_dimension_numbers<[1], [0], [0], [1], [0, 0, 1, 1], [], []>} : vector<512x40xbf16>, vector<40x128xbf16>, vector<512x128xf32> -> vector<512x128xf32>
    %c0_3 = arith.constant 0 : index
    %c0_4 = arith.constant 0 : index
    %3 = vector.load %arg3[%c0_3, %c0_4] : memref<512x128xf32, #tpu.memory_space<vmem>>, vector<512x128xf32>
    tpu.vector_store %arg3[%c0_3, %c0_4], %2 {strides = array<i32>} : memref<512x128xf32, #tpu.memory_space<vmem>>, vector<512x128xf32>,
    return
  }
  func.func @transform_0(%arg0: i32) -> (i32, i32) {
    %c0_i32 = arith.constant 0 : i32
    %c0_i32_0 = arith.constant 0 : i32
    return %arg0, %c0_i32 : i32, i32
  }
  func.func @transform_1(%arg0: i32) -> (i32, i32) {
    %c0_i32 = arith.constant 0 : i32
    %c0_i32_0 = arith.constant 0 : i32
    %c0_i32_1 = arith.constant 0 : i32
    return %c0_i32, %c0_i32_0 : i32, i32
  }
  func.func @transform_2(%arg0: i32) -> (i32, i32) {
    %c0_i32 = arith.constant 0 : i32
    %c0_i32_0 = arith.constant 0 : i32
    return %arg0, %c0_i32 : i32, i32
  }
}

</mosaic_0001>

<llo_original>
// kernel: tpu_custom_call.1
$region0: #{tpu_custom_call.1}
  #allocation0 [shape = 'u32[]', space=smem, size = 0x4, offset = 0x4, fixed_abs, tag = 'smem constant byte address 0x4 - core index']
  #allocation1 [shape = 'u32[144,128]{1,0:T(1,128)}', space=vmem, size = 0x12000, scoped, tag = 'internal scratch']
  %s0 = inlined_call_operand.vmem [shape: bf16[512,40], index: 0, kind: input, shape index: {}]
  %s1 = inlined_call_operand.vmem [shape: bf16[40,128], index: 1, kind: input, shape index: {}]
  %s2 = inlined_call_operand.hbm [shape: f32[512,128], index: 2, kind: output, shape index: {}]
  %s3 = sld [smem:[#allocation0]]
  $region18: #{tpu_custom_call.1} parent=0
    _
  %s5 = ssub.s32 1, %s3
  %s6 = scalar_select 0, %s5, %s3
  $region1: #{tpu_custom_call.1} parent=0
    #allocation2 [shape = 'u8[262144]{0}', space=vmem, size = 0x40000, scoped, tag = 'output window, operand 0, single buffered']
    #allocation3 [shape = 's32[1]{0}', space=sflag, size = 0x4, scoped, tag = 'scoped memory for tpu_custom_call.1']
    %7 = vsyncpa [#allocation3], 0
    // Predicated region
    $region2: #{tpu_custom_call.1} parent=1 // pred_check
      _
    $region3: #{tpu_custom_call.1} parent=1 // pred_check_branch
      %9 = sbr.rel (0) target = $region5
    $region4: #{tpu_custom_call.1} parent=1 // pred_region
      _
    $region5: #{tpu_custom_call.1} parent=1 // pred_fallthru
      _
    // Predicated region
    $region6: #{tpu_custom_call.1} parent=1 // pred_check
      _
    $region7: #{tpu_custom_call.1} parent=1 // pred_check_branch
      %11 = sbr.rel (0) target = $region9
    $region8: #{tpu_custom_call.1} parent=1 // pred_region
      _
    $region9: #{tpu_custom_call.1} parent=1 // pred_fallthru
      _
    %v13 = vld [vmem:[%s0] sm:$0xf]
    %v14 = vld [vmem:[%s0 + $0x4] sm:$0xf]
    %v15 = vld [vmem:[%s0 + $0x8] sm:$0xf]
    %v16 = vld [vmem:[%s0 + $0xc] sm:$0xf]
    %v17 = vld [vmem:[%s0 + $0x10] sm:$0xf]
    %v18 = vld [vmem:[%s0 + $0x14] sm:$0xf]
    %v19 = vld [vmem:[%s0 + $0x18] sm:$0xf]
    %v20 = vld [vmem:[%s0 + $0x1c] sm:$0xf]
    %v21 = vld [vmem:[%s0 + $0x20] sm:$0xf]
    %v22 = vld [vmem:[%s0 + $0x24] sm:$0xf]
    %v23 = vld [vmem:[%s0 + $0x28] sm:$0xf]
    %v24 = vld [vmem:[%s0 + $0x2c] sm:$0xf]
    %v25 = vld [vmem:[%s0 + $0x30] sm:$0xf]
    %v26 = vld [vmem:[%s0 + $0x34] sm:$0xf]
    %v27 = vld [vmem:[%s0 + $0x38] sm:$0xf]
    %v28 = vld [vmem:[%s0 + $0x3c] sm:$0xf]
    %v29 = vld [vmem:[%s0 + $0x40] sm:$0xf]
    %v30 = vld [vmem:[%s0 + $0x44] sm:$0xf]
    %v31 = vld [vmem:[%s0 + $0x48] sm:$0xf]
    %v32 = vld [vmem:[%s0 + $0x4c] sm:$0xf]
    %v33 = vld [vmem:[%s0 + $0x50] sm:$0xf]
    %v34 = vld [vmem:[%s0 + $0x54] sm:$0xf]
    %v35 = vld [vmem:[%s0 + $0x58] sm:$0xf]
    %v36 = vld [vmem:[%s0 + $0x5c] sm:$0xf]
    %v37 = vld [vmem:[%s0 + $0x60] sm:$0xf]
    %v38 = vld [vmem:[%s0 + $0x64] sm:$0xf]
    %v39 = vld [vmem:[%s0 + $0x68] sm:$0xf]
    %v40 = vld [vmem:[%s0 + $0x6c] sm:$0xf]
    %v41 = vld [vmem:[%s0 + $0x70] sm:$0xf]
    %v42 = vld [vmem:[%s0 + $0x74] sm:$0xf]
    %v43 = vld [vmem:[%s0 + $0x78] sm:$0xf]
    %v44 = vld [vmem:[%s0 + $0x7c] sm:$0xf]
    %v45 = vld [vmem:[%s0 + $0x80] sm:$0xf]
    %v46 = vld [vmem:[%s0 + $0x84] sm:$0xf]
    %v47 = vld [vmem:[%s0 + $0x88] sm:$0xf]
    %v48 = vld [vmem:[%s0 + $0x8c] sm:$0xf]
    %v49 = vld [vmem:[%s0 + $0x90] sm:$0xf]
    %v50 = vld [vmem:[%s0 + $0x94] sm:$0xf]
    %v51 = vld [vmem:[%s0 + $0x98] sm:$0xf]
    %v52 = vld [vmem:[%s0 + $0x9c] sm:$0xf]
    %v53 = vld [vmem:[%s0 + $0xa0] sm:$0xf]
    %v54 = vld [vmem:[%s0 + $0xa4] sm:$0xf]
    %v55 = vld [vmem:[%s0 + $0xa8] sm:$0xf]
    %v56 = vld [vmem:[%s0 + $0xac] sm:$0xf]
    %v57 = vld [vmem:[%s0 + $0xb0] sm:$0xf]
    %v58 = vld [vmem:[%s0 + $0xb4] sm:$0xf]
    %v59 = vld [vmem:[%s0 + $0xb8] sm:$0xf]
    %v60 = vld [vmem:[%s0 + $0xbc] sm:$0xf]
    %v61 = vld [vmem:[%s0 + $0xc0] sm:$0xf]
    %v62 = vld [vmem:[%s0 + $0xc4] sm:$0xf]
    %v63 = vld [vmem:[%s0 + $0xc8] sm:$0xf]
    %v64 = vld [vmem:[%s0 + $0xcc] sm:$0xf]
    %v65 = vld [vmem:[%s0 + $0xd0] sm:$0xf]
    %v66 = vld [vmem:[%s0 + $0xd4] sm:$0xf]
    %v67 = vld [vmem:[%s0 + $0xd8] sm:$0xf]
    %v68 = vld [vmem:[%s0 + $0xdc] sm:$0xf]
    %v69 = vld [vmem:[%s0 + $0xe0] sm:$0xf]
    %v70 = vld [vmem:[%s0 + $0xe4] sm:$0xf]
    %v71 = vld [vmem:[%s0 + $0xe8] sm:$0xf]
    %v72 = vld [vmem:[%s0 + $0xec] sm:$0xf]
    %v73 = vld [vmem:[%s0 + $0xf0] sm:$0xf]
    %v74 = vld [vmem:[%s0 + $0xf4] sm:$0xf]
    %v75 = vld [vmem:[%s0 + $0xf8] sm:$0xf]
    %v76 = vld [vmem:[%s0 + $0xfc] sm:$0xf]
    %v77 = vld [vmem:[%s1] sm:$0xf]
    %v78 = vld [vmem:[%s1 + $0x4] sm:$0xf]
    %v79 = vld [vmem:[%s1 + $0x8] sm:$0xf]
    %v80 = vld [vmem:[%s1 + $0xc] sm:$0xf]
    %v81 = vld [vmem:[%s1 + $0x10] sm:$0xf]
    %v146 = vunpack.c.l.b16 %v13
    %v147 = vunpack.c.l.b16 %v14
    %v148 = vunpack.c.l.b16 %v15
    %v149 = vunpack.c.l.b16 %v16
    %v150 = vunpack.c.l.b16 %v17
    %v151 = vunpack.c.l.b16 %v18
    %v152 = vunpack.c.l.b16 %v19
    %v153 = vunpack.c.l.b16 %v20
    %v154 = vunpack.c.l.b16 %v21
    %v155 = vunpack.c.l.b16 %v22
    %v156 = vunpack.c.l.b16 %v23
    %v157 = vunpack.c.l.b16 %v24
    %v158 = vunpack.c.l.b16 %v25
    %v159 = vunpack.c.l.b16 %v26
    %v160 = vunpack.c.l.b16 %v27
    %v161 = vunpack.c.l.b16 %v28
    %v162 = vunpack.c.l.b16 %v29
    %v163 = vunpack.c.l.b16 %v30
    %v164 = vunpack.c.l.b16 %v31
    %v165 = vunpack.c.l.b16 %v32
    %v166 = vunpack.c.l.b16 %v33
    %v167 = vunpack.c.l.b16 %v34
    %v168 = vunpack.c.l.b16 %v35
    %v169 = vunpack.c.l.b16 %v36
    %v170 = vunpack.c.l.b16 %v37
    %v171 = vunpack.c.l.b16 %v38
    %v172 = vunpack.c.l.b16 %v39
    %v173 = vunpack.c.l.b16 %v40
    %v174 = vunpack.c.l.b16 %v41
    %v175 = vunpack.c.l.b16 %v42
    %v176 = vunpack.c.l.b16 %v43
    %v177 = vunpack.c.l.b16 %v44
    %v178 = vunpack.c.l.b16 %v45
    %v179 = vunpack.c.l.b16 %v46
    %v180 = vunpack.c.l.b16 %v47
    %v181 = vunpack.c.l.b16 %v48
    %v182 = vunpack.c.l.b16 %v49
    %v183 = vunpack.c.l.b16 %v50
    %v184 = vunpack.c.l.b16 %v51
    %v185 = vunpack.c.l.b16 %v52
    %v186 = vunpack.c.l.b16 %v53
    %v187 = vunpack.c.l.b16 %v54
    %v188 = vunpack.c.l.b16 %v55
    %v189 = vunpack.c.l.b16 %v56
    %v190 = vunpack.c.l.b16 %v57
    %v191 = vunpack.c.l.b16 %v58
    %v192 = vunpack.c.l.b16 %v59
    %v193 = vunpack.c.l.b16 %v60
    %v194 = vunpack.c.l.b16 %v61
    %v195 = vunpack.c.l.b16 %v62
    %v196 = vunpack.c.l.b16 %v63
    %v197 = vunpack.c.l.b16 %v64
    %v198 = vunpack.c.l.b16 %v65
    %v199 = vunpack.c.l.b16 %v66
    %v200 = vunpack.c.l.b16 %v67
    %v201 = vunpack.c.l.b16 %v68
    %v202 = vunpack.c.l.b16 %v69
    %v203 = vunpack.c.l.b16 %v70
    %v204 = vunpack.c.l.b16 %v71
    %v205 = vunpack.c.l.b16 %v72
    %v206 = vunpack.c.l.b16 %v73
    %v207 = vunpack.c.l.b16 %v74
    %v208 = vunpack.c.l.b16 %v75
    %v209 = vunpack.c.l.b16 %v76
    %v210 = vpack.c.b16 %v147, %v146
    %v211 = vpack.c.b16 %v149, %v148
    %v212 = vpack.c.b16 %v151, %v150
    %v213 = vpack.c.b16 %v153, %v152
    %v214 = vpack.c.b16 %v155, %v154
    %v215 = vpack.c.b16 %v157, %v156
    %v216 = vpack.c.b16 %v159, %v158
    %v217 = vpack.c.b16 %v161, %v160
    %v218 = vpack.c.b16 %v163, %v162
    %v219 = vpack.c.b16 %v165, %v164
    %v220 = vpack.c.b16 %v167, %v166
    %v221 = vpack.c.b16 %v169, %v168
    %v222 = vpack.c.b16 %v171, %v170
    %v223 = vpack.c.b16 %v173, %v172
    %v224 = vpack.c.b16 %v175, %v174
    %v225 = vpack.c.b16 %v177, %v176
    %v226 = vpack.c.b16 %v179, %v178
    %v227 = vpack.c.b16 %v181, %v180
    %v228 = vpack.c.b16 %v183, %v182
    %v229 = vpack.c.b16 %v185, %v184
    %v230 = vpack.c.b16 %v187, %v186
    %v231 = vpack.c.b16 %v189, %v188
    %v232 = vpack.c.b16 %v191, %v190
    %v233 = vpack.c.b16 %v193, %v192
    %v234 = vpack.c.b16 %v195, %v194
    %v235 = vpack.c.b16 %v197, %v196
    %v236 = vpack.c.b16 %v199, %v198
    %v237 = vpack.c.b16 %v201, %v200
    %v238 = vpack.c.b16 %v203, %v202
    %v239 = vpack.c.b16 %v205, %v204
    %v240 = vpack.c.b16 %v207, %v206
    %v241 = vpack.c.b16 %v209, %v208
    %v247 = vunpack.c.l.b16 %v77
    %v248 = vunpack.c.l.b16 %v78
    %v249 = vunpack.c.l.b16 %v79
    %v250 = vunpack.c.l.b16 %v80
    %v251 = vunpack.c.l.b16 %v81
    %v252 = vpack.c.b16 %v248, %v247
    %v253 = vpack.c.b16 %v250, %v249
    %v254 = vpack.c.b16 %v251, %v251
    %vm257 = vcmask 326656
    %v259 = vsel %vm257, %v210, 0
    %v262 = vsel %vm257, %v211, 0
    %v265 = vsel %vm257, %v212, 0
    %v268 = vsel %vm257, %v213, 0
    %v271 = vsel %vm257, %v214, 0
    %v274 = vsel %vm257, %v215, 0
    %v277 = vsel %vm257, %v216, 0
    %v280 = vsel %vm257, %v217, 0
    %v283 = vsel %vm257, %v218, 0
    %v286 = vsel %vm257, %v219, 0
    %v289 = vsel %vm257, %v220, 0
    %v292 = vsel %vm257, %v221, 0
    %v295 = vsel %vm257, %v222, 0
    %v298 = vsel %vm257, %v223, 0
    %v301 = vsel %vm257, %v224, 0
    %v304 = vsel %vm257, %v225, 0
    %v307 = vsel %vm257, %v226, 0
    %v310 = vsel %vm257, %v227, 0
    %v313 = vsel %vm257, %v228, 0
    %v316 = vsel %vm257, %v229, 0
    %v319 = vsel %vm257, %v230, 0
    %v322 = vsel %vm257, %v231, 0
    %v325 = vsel %vm257, %v232, 0
    %v328 = vsel %vm257, %v233, 0
    %v331 = vsel %vm257, %v234, 0
    %v334 = vsel %vm257, %v235, 0
    %v337 = vsel %vm257, %v236, 0
    %v340 = vsel %vm257, %v237, 0
    %v343 = vsel %vm257, %v238, 0
    %v346 = vsel %vm257, %v239, 0
    %v349 = vsel %vm257, %v240, 0
    %v352 = vsel %vm257, %v241, 0
    %vm354 = vcmask 1043456
    %v356 = vsel %vm354, %v254, 0
    %358 = vmatprep.subr.bf16.mxu0 0
    %359 = vmatpush1.bf16.msra.mxu0 %v252
    %360 = vmatprep.subr.bf16.mxu0 0
    %361 = vmatpush1.bf16.msra.mxu0 %v253
    %362 = vmatprep.subr.bf16.mxu0 0
    %363 = vmatpush1.bf16.msra.mxu0 %v356
    %364 = vmatprep.subr.bf16.mxu0 0
    %365 = vmatpush1.bf16.msra.mxu0 0
    %366 = vmatprep.subr.bf16.mxu0 0
    %367 = vmatpush1.bf16.msra.mxu0 0
    %368 = vmatprep.subr.bf16.mxu0 0
    %369 = vmatpush1.bf16.msra.mxu0 0
    %370 = vmatprep.subr.bf16.mxu0 0
    %371 = vmatpush1.bf16.msra.mxu0 0
    %372 = vmatprep.subr.bf16.mxu0 0
    %373 = vmatpush1.bf16.msra.mxu0 0
    %374 = vmatprep.subr.bf16.mxu0 0
    %375 = vmatpush1.bf16.msra.mxu0 0
    %376 = vmatprep.subr.bf16.mxu0 0
    %377 = vmatpush1.bf16.msra.mxu0 0
    %378 = vmatprep.subr.bf16.mxu0 0
    %379 = vmatpush1.bf16.msra.mxu0 0
    %380 = vmatprep.subr.bf16.mxu0 0
    %381 = vmatpush1.bf16.msra.mxu0 0
    %382 = vmatprep.subr.bf16.mxu0 0
    %383 = vmatpush1.bf16.msra.mxu0 0
    %384 = vmatprep.subr.bf16.mxu0 0
    %385 = vmatpush1.bf16.msra.mxu0 0
    %386 = vmatprep.subr.bf16.mxu0 0
    %387 = vmatpush1.bf16.msra.mxu0 0
    %388 = vmatprep.subr.bf16.mxu0 0
    %389 = vmatpush1.bf16.msra.mxu0 0
    %390 = vmatprep.mubr.bf16.mxu0 0
    %391 = vmatmul.mubr.bf16.gmra.mrb[0].mxu0 %v259
    %v392 = vpop.f32.mrb[0].mxu0
    %v393 = vadd.f32 0.0, %v392
    %v394 = vpop.f32.mrb[0].mxu0
    %v395 = vpop.f32.mrb[0].mxu0
    %v396 = vadd.f32 0.0, %v395
    %v397 = vpop.f32.mrb[0].mxu0
    %398 = vmatprep.mubr.bf16.mxu0 0
    %399 = vmatmul.mubr.bf16.gmra.mrb[0].mxu0 %v262
    %v400 = vpop.f32.mrb[0].mxu0
    %v401 = vadd.f32 0.0, %v400
    %v402 = vpop.f32.mrb[0].mxu0
    %v403 = vpop.f32.mrb[0].mxu0
    %v404 = vadd.f32 0.0, %v403
    %v405 = vpop.f32.mrb[0].mxu0
    %406 = vmatprep.mubr.bf16.mxu0 0
    %407 = vmatmul.mubr.bf16.gmra.mrb[0].mxu0 %v265
    %v408 = vpop.f32.mrb[0].mxu0
    %v409 = vadd.f32 0.0, %v408
    %v410 = vpop.f32.mrb[0].mxu0
    %v411 = vpop.f32.mrb[0].mxu0
    %v412 = vadd.f32 0.0, %v411
    %v413 = vpop.f32.mrb[0].mxu0
    %414 = vmatprep.mubr.bf16.mxu0 0
    %415 = vmatmul.mubr.bf16.gmra.mrb[0].mxu0 %v268
    %v416 = vpop.f32.mrb[0].mxu0
    %v417 = vadd.f32 0.0, %v416
    %v418 = vpop.f32.mrb[0].mxu0
    %v419 = vpop.f32.mrb[0].mxu0
    %v420 = vadd.f32 0.0, %v419
    %v421 = vpop.f32.mrb[0].mxu0
    %422 = vmatprep.mubr.bf16.mxu0 0
    %423 = vmatmul.mubr.bf16.gmra.mrb[0].mxu0 %v271
    %v424 = vpop.f32.mrb[0].mxu0
    %v425 = vadd.f32 0.0, %v424
    %v426 = vpop.f32.mrb[0].mxu0
    %v427 = vpop.f32.mrb[0].mxu0
    %v428 = vadd.f32 0.0, %v427
    %v429 = vpop.f32.mrb[0].mxu0
    %430 = vmatprep.mubr.bf16.mxu0 0
    %431 = vmatmul.mubr.bf16.gmra.mrb[0].mxu0 %v274
    %v432 = vpop.f32.mrb[0].mxu0
    %v433 = vadd.f32 0.0, %v432
    %v434 = vpop.f32.mrb[0].mxu0
    %v435 = vpop.f32.mrb[0].mxu0
    %v436 = vadd.f32 0.0, %v435
    %v437 = vpop.f32.mrb[0].mxu0
    %438 = vmatprep.mubr.bf16.mxu0 0
    %439 = vmatmul.mubr.bf16.gmra.mrb[0].mxu0 %v277
    %v440 = vpop.f32.mrb[0].mxu0
    %v441 = vadd.f32 0.0, %v440
    %v442 = vpop.f32.mrb[0].mxu0
    %v443 = vpop.f32.mrb[0].mxu0
    %v444 = vadd.f32 0.0, %v443
    %v445 = vpop.f32.mrb[0].mxu0
    %446 = vmatprep.mubr.bf16.mxu0 0
    %447 = vmatmul.mubr.bf16.gmra.mrb[0].mxu0 %v280
    %v448 = vpop.f32.mrb[0].mxu0
    %v449 = vadd.f32 0.0, %v448
    %v450 = vpop.f32.mrb[0].mxu0
    %v451 = vpop.f32.mrb[0].mxu0
    %v452 = vadd.f32 0.0, %v451
    %v453 = vpop.f32.mrb[0].mxu0
    %454 = vmatprep.mubr.bf16.mxu0 0
    %455 = vmatmul.mubr.bf16.gmra.mrb[0].mxu0 %v283
    %v456 = vpop.f32.mrb[0].mxu0
    %v457 = vadd.f32 0.0, %v456
    %v458 = vpop.f32.mrb[0].mxu0
    %v459 = vpop.f32.mrb[0].mxu0
    %v460 = vadd.f32 0.0, %v459
    %v461 = vpop.f32.mrb[0].mxu0
    %462 = vmatprep.mubr.bf16.mxu0 0
    %463 = vmatmul.mubr.bf16.gmra.mrb[0].mxu0 %v286
    %v464 = vpop.f32.mrb[0].mxu0
    %v465 = vadd.f32 0.0, %v464
    %v466 = vpop.f32.mrb[0].mxu0
    %v467 = vpop.f32.mrb[0].mxu0
    %v468 = vadd.f32 0.0, %v467
    %v469 = vpop.f32.mrb[0].mxu0
    %470 = vmatprep.mubr.bf16.mxu0 0
    %471 = vmatmul.mubr.bf16.gmra.mrb[0].mxu0 %v289
    %v472 = vpop.f32.mrb[0].mxu0
    %v473 = vadd.f32 0.0, %v472
    %v474 = vpop.f32.mrb[0].mxu0
    %v475 = vpop.f32.mrb[0].mxu0
    %v476 = vadd.f32 0.0, %v475
    %v477 = vpop.f32.mrb[0].mxu0
    %478 = vmatprep.mubr.bf16.mxu0 0
    %479 = vmatmul.mubr.bf16.gmra.mrb[0].mxu0 %v292
    %v480 = vpop.f32.mrb[0].mxu0
    %v481 = vadd.f32 0.0, %v480
    %v482 = vpop.f32.mrb[0].mxu0
    %v483 = vpop.f32.mrb[0].mxu0
    %v484 = vadd.f32 0.0, %v483
    %v485 = vpop.f32.mrb[0].mxu0
    %486 = vmatprep.mubr.bf16.mxu0 0
    %487 = vmatmul.mubr.bf16.gmra.mrb[0].mxu0 %v295
    %v488 = vpop.f32.mrb[0].mxu0
    %v489 = vadd.f32 0.0, %v488
    %v490 = vpop.f32.mrb[0].mxu0
    %v491 = vpop.f32.mrb[0].mxu0
    %v492 = vadd.f32 0.0, %v491
    %v493 = vpop.f32.mrb[0].mxu0
    %494 = vmatprep.mubr.bf16.mxu0 0
    %495 = vmatmul.mubr.bf16.gmra.mrb[0].mxu0 %v298
    %v496 = vpop.f32.mrb[0].mxu0
    %v497 = vadd.f32 0.0, %v496
    %v498 = vpop.f32.mrb[0].mxu0
    %v499 = vpop.f32.mrb[0].mxu0
    %v500 = vadd.f32 0.0, %v499
    %v501 = vpop.f32.mrb[0].mxu0
    %502 = vmatprep.mubr.bf16.mxu0 0
    %503 = vmatmul.mubr.bf16.gmra.mrb[0].mxu0 %v301
    %v504 = vpop.f32.mrb[0].mxu0
    %v505 = vadd.f32 0.0, %v504
    %v506 = vpop.f32.mrb[0].mxu0
    %v507 = vpop.f32.mrb[0].mxu0
    %v508 = vadd.f32 0.0, %v507
    %v509 = vpop.f32.mrb[0].mxu0
    %510 = vmatprep.mubr.bf16.mxu0 0
    %511 = vmatmul.mubr.bf16.gmra.mrb[0].mxu0 %v304
    %v512 = vpop.f32.mrb[0].mxu0
    %v513 = vadd.f32 0.0, %v512
    %v514 = vpop.f32.mrb[0].mxu0
    %v515 = vpop.f32.mrb[0].mxu0
    %v516 = vadd.f32 0.0, %v515
    %v517 = vpop.f32.mrb[0].mxu0
    %518 = vmatprep.mubr.bf16.mxu0 0
    %519 = vmatmul.mubr.bf16.gmra.mrb[0].mxu0 %v307
    %v520 = vpop.f32.mrb[0].mxu0
    %v521 = vadd.f32 0.0, %v520
    %v522 = vpop.f32.mrb[0].mxu0
    %v523 = vpop.f32.mrb[0].mxu0
    %v524 = vadd.f32 0.0, %v523
    %v525 = vpop.f32.mrb[0].mxu0
    %526 = vmatprep.mubr.bf16.mxu0 0
    %527 = vmatmul.mubr.bf16.gmra.mrb[0].mxu0 %v310
    %v528 = vpop.f32.mrb[0].mxu0
    %v529 = vadd.f32 0.0, %v528
    %v530 = vpop.f32.mrb[0].mxu0
    %v531 = vpop.f32.mrb[0].mxu0
    %v532 = vadd.f32 0.0, %v531
    %v533 = vpop.f32.mrb[0].mxu0
    %534 = vmatprep.mubr.bf16.mxu0 0
    %535 = vmatmul.mubr.bf16.gmra.mrb[0].mxu0 %v313
    %v536 = vpop.f32.mrb[0].mxu0
    %v537 = vadd.f32 0.0, %v536
    %v538 = vpop.f32.mrb[0].mxu0
    %v539 = vpop.f32.mrb[0].mxu0
    %v540 = vadd.f32 0.0, %v539
    %v541 = vpop.f32.mrb[0].mxu0
    %542 = vmatprep.mubr.bf16.mxu0 0
    %543 = vmatmul.mubr.bf16.gmra.mrb[0].mxu0 %v316
    %v544 = vpop.f32.mrb[0].mxu0
    %v545 = vadd.f32 0.0, %v544
    %v546 = vpop.f32.mrb[0].mxu0
    %v547 = vpop.f32.mrb[0].mxu0
    %v548 = vadd.f32 0.0, %v547
    %v549 = vpop.f32.mrb[0].mxu0
    %550 = vmatprep.mubr.bf16.mxu0 0
    %551 = vmatmul.mubr.bf16.gmra.mrb[0].mxu0 %v319
    %v552 = vpop.f32.mrb[0].mxu0
    %v553 = vadd.f32 0.0, %v552
    %v554 = vpop.f32.mrb[0].mxu0
    %v555 = vpop.f32.mrb[0].mxu0
    %v556 = vadd.f32 0.0, %v555
    %v557 = vpop.f32.mrb[0].mxu0
    %558 = vmatprep.mubr.bf16.mxu0 0
    %559 = vmatmul.mubr.bf16.gmra.mrb[0].mxu0 %v322
    %v560 = vpop.f32.mrb[0].mxu0
    %v561 = vadd.f32 0.0, %v560
    %v562 = vpop.f32.mrb[0].mxu0
    %v563 = vpop.f32.mrb[0].mxu0
    %v564 = vadd.f32 0.0, %v563
    %v565 = vpop.f32.mrb[0].mxu0
    %566 = vmatprep.mubr.bf16.mxu0 0
    %567 = vmatmul.mubr.bf16.gmra.mrb[0].mxu0 %v325
    %v568 = vpop.f32.mrb[0].mxu0
    %v569 = vadd.f32 0.0, %v568
    %v570 = vpop.f32.mrb[0].mxu0
    %v571 = vpop.f32.mrb[0].mxu0
    %v572 = vadd.f32 0.0, %v571
    %v573 = vpop.f32.mrb[0].mxu0
    %574 = vmatprep.mubr.bf16.mxu0 0
    %575 = vmatmul.mubr.bf16.gmra.mrb[0].mxu0 %v328
    %v576 = vpop.f32.mrb[0].mxu0
    %v577 = vadd.f32 0.0, %v576
    %v578 = vpop.f32.mrb[0].mxu0
    %v579 = vpop.f32.mrb[0].mxu0
    %v580 = vadd.f32 0.0, %v579
    %v581 = vpop.f32.mrb[0].mxu0
    %582 = vmatprep.mubr.bf16.mxu0 0
    %583 = vmatmul.mubr.bf16.gmra.mrb[0].mxu0 %v331
    %v584 = vpop.f32.mrb[0].mxu0
    %v585 = vadd.f32 0.0, %v584
    %v586 = vpop.f32.mrb[0].mxu0
    %v587 = vpop.f32.mrb[0].mxu0
    %v588 = vadd.f32 0.0, %v587
    %v589 = vpop.f32.mrb[0].mxu0
    %590 = vmatprep.mubr.bf16.mxu0 0
    %591 = vmatmul.mubr.bf16.gmra.mrb[0].mxu0 %v334
    %v592 = vpop.f32.mrb[0].mxu0
    %v593 = vadd.f32 0.0, %v592
    %v594 = vpop.f32.mrb[0].mxu0
    %v595 = vpop.f32.mrb[0].mxu0
    %v596 = vadd.f32 0.0, %v595
    %v597 = vpop.f32.mrb[0].mxu0
    %598 = vmatprep.mubr.bf16.mxu0 0
    %599 = vmatmul.mubr.bf16.gmra.mrb[0].mxu0 %v337
    %v600 = vpop.f32.mrb[0].mxu0
    %v601 = vadd.f32 0.0, %v600
    %v602 = vpop.f32.mrb[0].mxu0
    %v603 = vpop.f32.mrb[0].mxu0
    %v604 = vadd.f32 0.0, %v603
    %v605 = vpop.f32.mrb[0].mxu0
    %606 = vmatprep.mubr.bf16.mxu0 0
    %607 = vmatmul.mubr.bf16.gmra.mrb[0].mxu0 %v340
    %v608 = vpop.f32.mrb[0].mxu0
    %v609 = vadd.f32 0.0, %v608
    %v610 = vpop.f32.mrb[0].mxu0
    %v611 = vpop.f32.mrb[0].mxu0
    %v612 = vadd.f32 0.0, %v611
    %v613 = vpop.f32.mrb[0].mxu0
    %614 = vmatprep.mubr.bf16.mxu0 0
    %615 = vmatmul.mubr.bf16.gmra.mrb[0].mxu0 %v343
    %v616 = vpop.f32.mrb[0].mxu0
    %v617 = vadd.f32 0.0, %v616
    %v618 = vpop.f32.mrb[0].mxu0
    %v619 = vpop.f32.mrb[0].mxu0
    %v620 = vadd.f32 0.0, %v619
    %v621 = vpop.f32.mrb[0].mxu0
    %622 = vmatprep.mubr.bf16.mxu0 0
    %623 = vmatmul.mubr.bf16.gmra.mrb[0].mxu0 %v346
    %v624 = vpop.f32.mrb[0].mxu0
    %v625 = vadd.f32 0.0, %v624
    %v626 = vpop.f32.mrb[0].mxu0
    %v627 = vpop.f32.mrb[0].mxu0
    %v628 = vadd.f32 0.0, %v627
    %v629 = vpop.f32.mrb[0].mxu0
    %630 = vmatprep.mubr.bf16.mxu0 0
    %631 = vmatmul.mubr.bf16.gmra.mrb[0].mxu0 %v349
    %v632 = vpop.f32.mrb[0].mxu0
    %v633 = vadd.f32 0.0, %v632
    %v634 = vpop.f32.mrb[0].mxu0
    %v635 = vpop.f32.mrb[0].mxu0
    %v636 = vadd.f32 0.0, %v635
    %v637 = vpop.f32.mrb[0].mxu0
    %638 = vmatprep.mubr.bf16.mxu0 0
    %639 = vmatmul.mubr.bf16.gmra.mrb[0].mxu0 %v352
    %v640 = vpop.f32.mrb[0].mxu0
    %v641 = vadd.f32 0.0, %v640
    %v642 = vpop.f32.mrb[0].mxu0
    %v643 = vpop.f32.mrb[0].mxu0
    %v644 = vadd.f32 0.0, %v643
    %v645 = vpop.f32.mrb[0].mxu0
    %646 = vdwg.mxu0
    %647 = vst [vmem:[#allocation2] sm:$0xff] %v393
    %648 = vst [vmem:[#allocation2 + $0x8] sm:$0xff] %v396
    %649 = vst [vmem:[#allocation2 + $0x10] sm:$0xff] %v401
    %650 = vst [vmem:[#allocation2 + $0x18] sm:$0xff] %v404
    %651 = vst [vmem:[#allocation2 + $0x20] sm:$0xff] %v409
    %652 = vst [vmem:[#allocation2 + $0x28] sm:$0xff] %v412
    %653 = vst [vmem:[#allocation2 + $0x30] sm:$0xff] %v417
    %654 = vst [vmem:[#allocation2 + $0x38] sm:$0xff] %v420
    %655 = vst [vmem:[#allocation2 + $0x40] sm:$0xff] %v425
    %656 = vst [vmem:[#allocation2 + $0x48] sm:$0xff] %v428
    %657 = vst [vmem:[#allocation2 + $0x50] sm:$0xff] %v433
    %658 = vst [vmem:[#allocation2 + $0x58] sm:$0xff] %v436
    %659 = vst [vmem:[#allocation2 + $0x60] sm:$0xff] %v441
    %660 = vst [vmem:[#allocation2 + $0x68] sm:$0xff] %v444
    %661 = vst [vmem:[#allocation2 + $0x70] sm:$0xff] %v449
    %662 = vst [vmem:[#allocation2 + $0x78] sm:$0xff] %v452
    %663 = vst [vmem:[#allocation2 + $0x80] sm:$0xff] %v457
    %664 = vst [vmem:[#allocation2 + $0x88] sm:$0xff] %v460
    %665 = vst [vmem:[#allocation2 + $0x90] sm:$0xff] %v465
    %666 = vst [vmem:[#allocation2 + $0x98] sm:$0xff] %v468
    %667 = vst [vmem:[#allocation2 + $0xa0] sm:$0xff] %v473
    %668 = vst [vmem:[#allocation2 + $0xa8] sm:$0xff] %v476
    %669 = vst [vmem:[#allocation2 + $0xb0] sm:$0xff] %v481
    %670 = vst [vmem:[#allocation2 + $0xb8] sm:$0xff] %v484
    %671 = vst [vmem:[#allocation2 + $0xc0] sm:$0xff] %v489
    %672 = vst [vmem:[#allocation2 + $0xc8] sm:$0xff] %v492
    %673 = vst [vmem:[#allocation2 + $0xd0] sm:$0xff] %v497
    %674 = vst [vmem:[#allocation2 + $0xd8] sm:$0xff] %v500
    %675 = vst [vmem:[#allocation2 + $0xe0] sm:$0xff] %v505
    %676 = vst [vmem:[#allocation2 + $0xe8] sm:$0xff] %v508
    %677 = vst [vmem:[#allocation2 + $0xf0] sm:$0xff] %v513
    %678 = vst [vmem:[#allocation2 + $0xf8] sm:$0xff] %v516
    %679 = vst [vmem:[#allocation2 + $0x100] sm:$0xff] %v521
    %680 = vst [vmem:[#allocation2 + $0x108] sm:$0xff] %v524
    %681 = vst [vmem:[#allocation2 + $0x110] sm:$0xff] %v529
    %682 = vst [vmem:[#allocation2 + $0x118] sm:$0xff] %v532
    %683 = vst [vmem:[#allocation2 + $0x120] sm:$0xff] %v537
    %684 = vst [vmem:[#allocation2 + $0x128] sm:$0xff] %v540
    %685 = vst [vmem:[#allocation2 + $0x130] sm:$0xff] %v545
    %686 = vst [vmem:[#allocation2 + $0x138] sm:$0xff] %v548
    %687 = vst [vmem:[#allocation2 + $0x140] sm:$0xff] %v553
    %688 = vst [vmem:[#allocation2 + $0x148] sm:$0xff] %v556
    %689 = vst [vmem:[#allocation2 + $0x150] sm:$0xff] %v561
    %690 = vst [vmem:[#allocation2 + $0x158] sm:$0xff] %v564
    %691 = vst [vmem:[#allocation2 + $0x160] sm:$0xff] %v569
    %692 = vst [vmem:[#allocation2 + $0x168] sm:$0xff] %v572
    %693 = vst [vmem:[#allocation2 + $0x170] sm:$0xff] %v577
    %694 = vst [vmem:[#allocation2 + $0x178] sm:$0xff] %v580
    %695 = vst [vmem:[#allocation2 + $0x180] sm:$0xff] %v585
    %696 = vst [vmem:[#allocation2 + $0x188] sm:$0xff] %v588
    %697 = vst [vmem:[#allocation2 + $0x190] sm:$0xff] %v593
    %698 = vst [vmem:[#allocation2 + $0x198] sm:$0xff] %v596
    %699 = vst [vmem:[#allocation2 + $0x1a0] sm:$0xff] %v601
    %700 = vst [vmem:[#allocation2 + $0x1a8] sm:$0xff] %v604
    %701 = vst [vmem:[#allocation2 + $0x1b0] sm:$0xff] %v609
    %702 = vst [vmem:[#allocation2 + $0x1b8] sm:$0xff] %v612
    %703 = vst [vmem:[#allocation2 + $0x1c0] sm:$0xff] %v617
    %704 = vst [vmem:[#allocation2 + $0x1c8] sm:$0xff] %v620
    %705 = vst [vmem:[#allocation2 + $0x1d0] sm:$0xff] %v625
    %706 = vst [vmem:[#allocation2 + $0x1d8] sm:$0xff] %v628
    %707 = vst [vmem:[#allocation2 + $0x1e0] sm:$0xff] %v633
    %708 = vst [vmem:[#allocation2 + $0x1e8] sm:$0xff] %v636
    %709 = vst [vmem:[#allocation2 + $0x1f0] sm:$0xff] %v641
    %710 = vst [vmem:[#allocation2 + $0x1f8] sm:$0xff] %v644
    // Predicated region
    $region10: #{tpu_custom_call.1} parent=1 // pred_check
      _
    $region11: #{tpu_custom_call.1} parent=1 // pred_check_branch
      %712 = sbr.rel (0) target = $region13
    $region12: #{tpu_custom_call.1} parent=1 // pred_region
      %s714 = ssub.s32 8192, 8192
      %715 = vsyncadd [#allocation3], %s714
      %s716 = sshll.u32 [#allocation2], 4
      %s717 = int_to_ptr.vmem [resolvable:$true] %s716
      %722 = dma.vmem_to_hbm [thread:$0]  %s717, 8192, %s2, [#allocation3], 128, 128, 8
    $region13: #{tpu_custom_call.1} parent=1 // pred_fallthru
      _
    // Predicated region
    $region14: #{tpu_custom_call.1} parent=1 // pred_check
      _
    $region15: #{tpu_custom_call.1} parent=1 // pred_check_branch
      %724 = sbr.rel (0) target = $region17
    $region16: #{tpu_custom_call.1} parent=1 // pred_region
      %725 = dma.done [#allocation3], 8192
    $region17: #{tpu_custom_call.1} parent=1 // pred_fallthru
      _
    %726 = vsyncpa [#allocation3], 1

</llo_original>
